<compile_context>
chip_gen: v5e
topology: v5e:2x2
jax: 0.10.0
libtpu: 0.0.40
codegen_flags: <defaults>
</compile_context>

<pallas_src>
import math

import jax
import jax.numpy as jnp
from jax import lax
from jax.experimental import pallas as pl
from jax.experimental.pallas import tpu as pltpu


def _round_up(v, m):
    return (v + m - 1) // m * m


def _cdiv(a, b):
    return (a + b - 1) // b


def _vmem_budget_bytes():
    """(capacity, budget): budget <= ~75% of physical VMEM (v7x only has 64 MiB)."""
    cap = 64 << 20  # conservative fallback == v7x physical VMEM
    try:
        info = pltpu.get_tpu_info()
        cap = int(getattr(info, "vmem_capacity_bytes", cap)) or cap
    except Exception:
        pass
    return cap, max(24 << 20, cap * 3 // 4)


def _num_tensorcores():
    """Best-effort TensorCore count (2 on v7x); falls back to 1."""
    try:
        info = pltpu.get_tpu_info()
        for attr in ("num_tensorcores", "tensorcore_count", "num_cores", "core_count"):
            v = getattr(info, attr, None)
            if isinstance(v, int) and v >= 1:
                return v
    except Exception:
        pass
    return 1


def _largest_aligned_divisor(kp, upper):
    """Largest t <= upper dividing kp, preferring multiples of 256 (v6e/v7x MXU),
    falling back to multiples of 128 (v5e)."""
    for gran in (256, 128):
        t = (upper // gran) * gran
        while t >= gran:
            if kp % t == 0:
                return t
            t -= gran
    return None


# ----------------------------- kernel bodies --------------------------------

def _fold_readout(h, a_row):
    """relu(h) * a folded lane-group by lane-group into a (tile_n, 128) slab.
    Pure VPU work (whole-vreg multiplies/adds); no XLU traffic in the hot loop."""
    p = jnp.maximum(h, 0.0) * a_row
    tile_k = p.shape[-1]                       # static, multiple of 128
    part = p[:, 0:128]
    for g in range(1, tile_k // 128):
        part = part + p[:, g * 128:(g + 1) * 128]
    return part


def _row_reduce(part):
    """Single cross-lane reduction of a (tile_n, 128) slab into a lane-dense
    (1, tile_n) row: ones(1,128) contracted with part's lane axis (MXU, once
    per N tile)."""
    ones = jnp.ones((1, 128), jnp.float32)
    return lax.dot_general(ones, part, (((1,), (1,)), ((), ())),
                           preferred_element_type=jnp.float32)


def _student_kernel_single(x_ref, wt_ref, a_ref, o_ref):
    # Whole (padded) K resident in one tile: no scratch, no init/finalize.
    h = jnp.dot(x_ref[...], wt_ref[...], preferred_element_type=jnp.float32)
    o_ref[0] = _row_reduce(_fold_readout(h, a_ref[...])).astype(o_ref.dtype)


def _student_kernel_tiled(x_ref, wt_ref, a_ref, o_ref, acc_ref):
    kj = pl.program_id(1)

    @pl.when(kj == 0)
    def _():
        acc_ref[...] = jnp.zeros_like(acc_ref)

    h = jnp.dot(x_ref[...], wt_ref[...], preferred_element_type=jnp.float32)
    acc_ref[...] += _fold_readout(h, a_ref[...])

    @pl.when(kj == pl.num_programs(1) - 1)
    def _():
        o_ref[0] = _row_reduce(acc_ref[...]).astype(o_ref.dtype)


# ------------------------------- wrappers ------------------------------------

def prepare_student_params(w, a, *, compute_dtype=jnp.bfloat16):
    """One-time parameter prep -- hoist this OUT of the per-call forward path.

    Returns (wt, a_row):
      wt    : (D, Kp) compute_dtype; pre-transposed W, K zero-padded to a
              multiple of 128 (all K blocks lane-aligned, no in-kernel w.T).
      a_row : (1, Kp) float32; readout vector with the 1/sqrt(D) first-layer
              scale folded in (valid: relu is positively homogeneous), zero
              padded.
    """
    w = jnp.asarray(w, jnp.float32)
    a = jnp.asarray(a, jnp.float32)
    k, d = w.shape
    assert a.shape == (k,)
    kp = _round_up(k, 128)
    wt = w.T.astype(compute_dtype)                  # (D, K)
    a_row = (a / math.sqrt(d)).reshape(1, k)
    if kp != k:
        wt = jnp.pad(wt, ((0, 0), (0, kp - k)))
        a_row = jnp.pad(a_row, ((0, 0), (0, kp - k)))
    return wt, a_row


def neural_network_student_forward(x, wt, a_row, *, tile_n=None, tile_k=None):
    """y[n] = relu(x[n] @ W.T / sqrt(D)) @ a via a Pallas TPU kernel.

    x        : (N, D) activations (cast to wt.dtype if needed).
    wt, a_row: output of prepare_student_params (computed once at init).
    """
    n, d = x.shape
    d2, kp = wt.shape
    assert d == d2 and a_row.shape == (1, kp) and kp % 128 == 0

    compute_dtype = jnp.dtype(wt.dtype)
    itm = compute_dtype.itemsize
    row_mult = 16 if itm < 4 else 8

    # For repeated inference feed x already in compute_dtype so this cast fuses
    # upstream instead of costing an extra HBM pass here.
    x_c = x if x.dtype == compute_dtype else x.astype(compute_dtype)

    cap, budget = _vmem_budget_bytes()

    def est_vmem(tn, tk, x_bufs):
        return (x_bufs * tn * d * itm      # x blocks
                + 2 * d * tk * itm         # W^T blocks (double-buffered)
                + 2 * tk * 4               # readout-row blocks
                + 2 * tn * 4               # output-row blocks
                + tn * 128 * 4)            # accumulator scratch

    auto_tile_n = tile_n is None
    if auto_tile_n:
        # Biggest row tile up to 512 (512-row blocks reach ~85% of HBM roofline).
        tile_n = min(512, _round_up(n, row_mult))
        # v7x megacore: prefer >=2 steps on the 'parallel' N axis when splittable.
        if _num_tensorcores() >= 2 and _cdiv(n, tile_n) < 2:
            cand = _round_up(_cdiv(n, 2), row_mult)
            if cand < n:
                tile_n = cand
    else:
        tile_n = _round_up(tile_n, row_mult)

    if tile_k is None:
        # Keep the whole (padded) K resident unless VMEM forces tiling; shrink
        # tile_k (256-aligned divisors, then 128) before touching tile_n.
        tile_k = kp
        while est_vmem(tile_n, tile_k, 3) > budget and tile_k > 256:
            nxt = _largest_aligned_divisor(kp, max(256, tile_k // 2))
            if nxt is None or nxt >= tile_k:
                break
            tile_k = nxt
    assert kp % tile_k == 0 and tile_k % 128 == 0, \
        "tile_k must be a 128-aligned divisor of the padded K"

    if auto_tile_n:
        while est_vmem(tile_n, tile_k, 3) > budget and tile_n > row_mult:
            tile_n = max(row_mult, _round_up(tile_n // 2, row_mult))

    grid_n = _cdiv(n, tile_n)
    grid_k = kp // tile_k
    grid = (grid_n, grid_k)

    # Deeper x buffering when D is small (DMA otherwise exposed behind a tiny matmul).
    x_index_map = lambda i, j: (i, 0)
    x_bufs = 3 if (d <= 512 and grid_n >= 3) else 2
    x_spec = pl.BlockSpec((tile_n, d), x_index_map)
    if x_bufs == 3 and hasattr(pl, "Buffered"):
        try:
            x_spec = pl.BlockSpec((tile_n, d), x_index_map,
                                  pipeline_mode=pl.Buffered(3))
        except TypeError:
            x_bufs = 2

    in_specs = [
        x_spec,
        pl.BlockSpec((d, tile_k), lambda i, j: (0, j)),   # pre-transposed W
        pl.BlockSpec((1, tile_k), lambda i, j: (0, j)),   # scaled readout row
    ]
    # Lane-dense output: one (1, tile_n) row per N tile.
    out_specs = pl.BlockSpec((1, 1, tile_n), lambda i, j: (i, 0, 0))
    out_shape = jax.ShapeDtypeStruct((grid_n, 1, tile_n), jnp.float32)

    if grid_k == 1:
        kernel, scratch = _student_kernel_single, []
    else:
        kernel, scratch = _student_kernel_tiled, [pltpu.VMEM((tile_n, 128), jnp.float32)]

    est = est_vmem(tile_n, tile_k, x_bufs)
    vmem_limit = int(min(cap, max(budget, 2 * est)))

    # NOTE: with (N, K) grid ordering the W^T block is re-fetched per N tile when
    # K is tiled (grid_k > 1); the common path keeps grid_k == 1. The estimate
    # below reflects the re-fetch.
    w_refetch = grid_n if grid_k > 1 else 1
    n_eff = grid_n * tile_n
    cost = pl.CostEstimate(
        flops=2 * n_eff * kp * d + 3 * n_eff * kp + 2 * n_eff * 128,
        transcendentals=0,
        bytes_accessed=(n * d * itm
                        + d * kp * itm * w_refetch
                        + kp * 4 * w_refetch
                        + n_eff * 4),
    )

    out = pl.pallas_call(
        kernel,
        out_shape=out_shape,
        grid_spec=pltpu.PrefetchScalarGridSpec(
            num_scalar_prefetch=0,
            grid=grid,
            in_specs=in_specs,
            out_specs=out_specs,
            scratch_shapes=scratch,
        ),
        compiler_params=pltpu.CompilerParams(
            dimension_semantics=("parallel", "arbitrary"),
            vmem_limit_bytes=vmem_limit,
        ),
        cost_estimate=cost,
    )(x_c, wt, a_row)

    return out.reshape(grid_n * tile_n)[:n]


def reference_forward(x, w, a):
    d = x.shape[-1]
    h = x @ w.T / math.sqrt(d)
    return jnp.maximum(h, 0.0) @ a


if __name__ == "__main__":
    # --- Small shapes consistent with the module: batch N=8, D=32, K=32. ---
    N, D, K = 8, 32, 32
    key = jax.random.PRNGKey(0)
    kx, kw = jax.random.split(key)
    x = jax.random.normal(kx, (N, D), dtype=jnp.float32)
    start_weight_student = jax.random.normal(kw, (K, D), dtype=jnp.float32) / math.sqrt(D)
    a = jnp.ones((K,), jnp.float32) / math.sqrt(K)
    a = a.at[1::2].set(-1.0 / math.sqrt(K))

    y_ref = reference_forward(x, start_weight_student, a)

    # f32 path: tight check against the reference.
    wt32, ar32 = prepare_student_params(start_weight_student, a, compute_dtype=jnp.float32)
    y32 = jax.block_until_ready(neural_network_student_forward(x, wt32, ar32))
    assert y32.shape == (N,)
    assert jnp.allclose(y32, y_ref, atol=1e-5, rtol=1e-5), (y32, y_ref)

    # bf16 default path: compare against the same math on bf16-rounded operands
    # (products are exact in f32, accumulation stays f32 -> tight tolerance).
    wtbf, arbf = prepare_student_params(start_weight_student, a)       # bfloat16 default
    ybf = jax.block_until_ready(neural_network_student_forward(x, wtbf, arbf))
    x_q = x.astype(jnp.bfloat16).astype(jnp.float32)
    w_q = start_weight_student.astype(jnp.bfloat16).astype(jnp.float32)
    y_ref_q = reference_forward(x_q, w_q, a)
    assert ybf.shape == (N,)
    assert jnp.allclose(ybf, y_ref_q, atol=1e-3, rtol=1e-3), (ybf, y_ref_q)

    # --- Moderate shapes: exercise K tiling (grid_k>1), multi-step ragged N grid,
    #     the (tile_n, 128) accumulator and the Buffered(3) x pipeline. ---
    N2, D2, K2 = 300, 128, 512
    k2x, k2w = jax.random.split(jax.random.PRNGKey(1))
    x2 = jax.random.normal(k2x, (N2, D2), dtype=jnp.float32)
    w2 = jax.random.normal(k2w, (K2, D2), dtype=jnp.float32) / math.sqrt(D2)
    a2 = jnp.ones((K2,), jnp.float32) / math.sqrt(K2)
    a2 = a2.at[1::2].set(-1.0 / math.sqrt(K2))

    wt2, ar2 = prepare_student_params(w2, a2)                          # bfloat16
    y2 = jax.block_until_ready(
        neural_network_student_forward(x2, wt2, ar2, tile_n=128, tile_k=256))
    y2_ref_q = reference_forward(x2.astype(jnp.bfloat16).astype(jnp.float32),
                                 w2.astype(jnp.bfloat16).astype(jnp.float32), a2)
    assert y2.shape == (N2,)
    assert jnp.allclose(y2, y2_ref_q, atol=2e-3, rtol=2e-3), \
        float(jnp.max(jnp.abs(y2 - y2_ref_q)))

    print("KERNEL_OK")
</pallas_src>

<mosaic_0001>
module attributes {stable_mosaic.version = 11 : i64} {
  func.func @_student_kernel_single(%arg0: i32, %arg1: i32, %arg2: memref<8x32xf32, #tpu.memory_space<vmem>>, %arg3: memref<32x128xf32, #tpu.memory_space<vmem>>, %arg4: memref<1x128xf32, #tpu.memory_space<vmem>>, %arg5: memref<1x1x8xf32, #tpu.memory_space<vmem>>) attributes {dimension_semantics = [#tpu.dimension_semantics<parallel>, #tpu.dimension_semantics<arbitrary>], iteration_bounds = array<i64: 1, 1>, scalar_prefetch = 0 : i64, scratch_operands = 0 : i64, tpu.core_type = #tpu.core_type<tc>, window_params = [{transform_indices = @transform_0, window_bounds = array<i64: 8, 32>}, {transform_indices = @transform_1, window_bounds = array<i64: 32, 128>}, {transform_indices = @transform_2, window_bounds = array<i64: 1, 128>}, {transform_indices = @transform_3, window_bounds = array<i64: 1, 1, 8>}]} {
    %c0 = arith.constant 0 : index
    %c0_0 = arith.constant 0 : index
    %0 = vector.load %arg2[%c0, %c0_0] : memref<8x32xf32, #tpu.memory_space<vmem>>, vector<8x32xf32>
    %c0_1 = arith.constant 0 : index
    %c0_2 = arith.constant 0 : index
    %1 = vector.load %arg3[%c0_1, %c0_2] : memref<32x128xf32, #tpu.memory_space<vmem>>, vector<32x128xf32>
    %cst = arith.constant dense<0.000000e+00> : vector<8x128xf32>
    %2 = tpu.matmul %0, %1, %cst {dimension_numbers = #tpu.dot_dimension_numbers<[1], [0], [0], [1], [0, 0, 1, 1], [], []>} : vector<8x32xf32>, vector<32x128xf32>, vector<8x128xf32> -> vector<8x128xf32>
    %c0_3 = arith.constant 0 : index
    %c0_4 = arith.constant 0 : index
    %3 = vector.load %arg4[%c0_3, %c0_4] : memref<1x128xf32, #tpu.memory_space<vmem>>, vector<1x128xf32>
    %cst_5 = arith.constant 0.000000e+00 : f32
    %4 = vector.broadcast %cst_5 : f32 to vector<8x128xf32>
    %5 = arith.maximumf %2, %4 : vector<8x128xf32>
    %6 = vector.broadcast %3 : vector<1x128xf32> to vector<8x128xf32>
    %7 = arith.mulf %5, %6 : vector<8x128xf32>
    %cst_6 = arith.constant 1.000000e+00 : f32
    %8 = vector.broadcast %cst_6 : f32 to vector<1x128xf32>
    %cst_7 = arith.constant dense<0.000000e+00> : vector<1x8xf32>
    %9 = tpu.matmul %8, %7, %cst_7 {dimension_numbers = #tpu.dot_dimension_numbers<[1], [1], [0], [0], [0, 0, 1, 0], [], []>} : vector<1x128xf32>, vector<8x128xf32>, vector<1x8xf32> -> vector<1x8xf32>
    %c0_8 = arith.constant 0 : index
    %c0_9 = arith.constant 0 : index
    %c0_10 = arith.constant 0 : index
    %10 = vector.load %arg5[%c0_8, %c0_9, %c0_10] : memref<1x1x8xf32, #tpu.memory_space<vmem>>, vector<1x1x8xf32>
    %11 = vector.shape_cast %10 : vector<1x1x8xf32> to vector<1x8xf32>
    %12 = vector.shape_cast %9 : vector<1x8xf32> to vector<1x1x8xf32>
    tpu.vector_store %arg5[%c0_8, %c0_9, %c0_10], %12 {strides = array<i32>} : memref<1x1x8xf32, #tpu.memory_space<vmem>>, vector<1x1x8xf32>,
    return
  }
  func.func @transform_0(%arg0: i32, %arg1: i32) -> (i32, i32) {
    %c0_i32 = arith.constant 0 : i32
    %c0_i32_0 = arith.constant 0 : i32
    return %arg0, %c0_i32 : i32, i32
  }
  func.func @transform_1(%arg0: i32, %arg1: i32) -> (i32, i32) {
    %c0_i32 = arith.constant 0 : i32
    %c0_i32_0 = arith.constant 0 : i32
    return %c0_i32, %arg1 : i32, i32
  }
  func.func @transform_2(%arg0: i32, %arg1: i32) -> (i32, i32) {
    %c0_i32 = arith.constant 0 : i32
    %c0_i32_0 = arith.constant 0 : i32
    return %c0_i32, %arg1 : i32, i32
  }
  func.func @transform_3(%arg0: i32, %arg1: i32) -> (i32, i32, i32) {
    %c0_i32 = arith.constant 0 : i32
    %c0_i32_0 = arith.constant 0 : i32
    %c0_i32_1 = arith.constant 0 : i32
    return %arg0, %c0_i32, %c0_i32_0 : i32, i32, i32
  }
}

</mosaic_0001>

<llo_original>
// kernel: tpu_custom_call.1
$region0: #{tpu_custom_call.1}
  #allocation0 [shape = 'u32[]', space=smem, size = 0x4, offset = 0x4, fixed_abs, tag = 'smem constant byte address 0x4 - core index']
  #allocation1 [shape = 'u32[72,128]{1,0:T(1,128)}', space=vmem, size = 0x9000, scoped, tag = 'internal scratch']
  %s0 = inlined_call_operand.hbm [shape: f32[8,32], index: 0, kind: input, shape index: {}]
  %s1 = inlined_call_operand.hbm [shape: f32[32,128], index: 1, kind: input, shape index: {}]
  %s2 = inlined_call_operand.vmem [shape: f32[1,128], index: 2, kind: input, shape index: {}]
  %s3 = inlined_call_operand.hbm [shape: f32[1,1,8], index: 3, kind: output, shape index: {}]
  %s4 = sld [smem:[#allocation0]]
  $region30: #{tpu_custom_call.1} parent=0
    _
  %s6 = ssub.s32 1, %s4
  %s7 = scalar_select 0, %s6, %s4
  $region1: #{tpu_custom_call.1} parent=0
    #allocation2 [shape = 'u8[4096]{0}', space=vmem, size = 0x1000, scoped, tag = 'input window, operand 0, single buffered']
    #allocation3 [shape = 's32[1]{0}', space=sflag, size = 0x4, scoped, tag = 'scoped memory for tpu_custom_call.1']
    #allocation4 [shape = 's32[1]{0}', space=sflag, size = 0x4, scoped, tag = 'scoped memory for tpu_custom_call.1']
    #allocation5 [shape = 'u8[16384]{0}', space=vmem, size = 0x4000, scoped, tag = 'input window, operand 1, single buffered']
    #allocation6 [shape = 's32[1]{0}', space=sflag, size = 0x4, scoped, tag = 'scoped memory for tpu_custom_call.1']
    #allocation7 [shape = 'u8[512]{0}', space=vmem, size = 0x400, scoped, tag = 'output window, operand 0, single buffered']
    %8 = vsyncpa [#allocation3], 0
    %9 = vsyncpa [#allocation6], 0
    %10 = vsyncpa [#allocation4], 0
    // Predicated region
    $region2: #{tpu_custom_call.1} parent=1 // pred_check
      _
    $region3: #{tpu_custom_call.1} parent=1 // pred_check_branch
      %12 = sbr.rel (0) target = $region5
    $region4: #{tpu_custom_call.1} parent=1 // pred_region
      %14 = vsyncadd [#allocation3], 0
      %s16 = sshll.u32 %s0, 4
      %s17 = int_to_ptr.hbm [resolvable:$true] %s16
      %s18 = sshll.u32 [#allocation2], 4
      %s19 = int_to_ptr.vmem [resolvable:$true] %s18
      %21 = dma.hbm_to_vmem [thread:$0]  %s17, 128, %s19, [#allocation3]
    $region5: #{tpu_custom_call.1} parent=1 // pred_fallthru
      _
    // Predicated region
    $region6: #{tpu_custom_call.1} parent=1 // pred_check
      _
    $region7: #{tpu_custom_call.1} parent=1 // pred_check_branch
      %23 = sbr.rel (0) target = $region9
    $region8: #{tpu_custom_call.1} parent=1 // pred_region
      %25 = vsyncadd [#allocation6], 0
      %s26 = sshll.u32 %s1, 4
      %s27 = int_to_ptr.hbm [resolvable:$true] %s26
      %s28 = sshll.u32 [#allocation5], 4
      %s29 = int_to_ptr.vmem [resolvable:$true] %s28
      %34 = dma.hbm_to_vmem [thread:$0]  %s27, 512, %s29, [#allocation6], 128, 128, 8
    $region9: #{tpu_custom_call.1} parent=1 // pred_fallthru
      _
    // Predicated region
    $region10: #{tpu_custom_call.1} parent=1 // pred_check
      _
    $region11: #{tpu_custom_call.1} parent=1 // pred_check_branch
      %36 = sbr.rel (0) target = $region13
    $region12: #{tpu_custom_call.1} parent=1 // pred_region
      _
    $region13: #{tpu_custom_call.1} parent=1 // pred_fallthru
      _
    // Predicated region
    $region14: #{tpu_custom_call.1} parent=1 // pred_check
      _
    $region15: #{tpu_custom_call.1} parent=1 // pred_check_branch
      %38 = sbr.rel (0) target = $region17
    $region16: #{tpu_custom_call.1} parent=1 // pred_region
      %40 = dma.done [#allocation3], 128
    $region17: #{tpu_custom_call.1} parent=1 // pred_fallthru
      _
    // Predicated region
    $region18: #{tpu_custom_call.1} parent=1 // pred_check
      _
    $region19: #{tpu_custom_call.1} parent=1 // pred_check_branch
      %42 = sbr.rel (0) target = $region21
    $region20: #{tpu_custom_call.1} parent=1 // pred_region
      %44 = dma.done [#allocation6], 512
    $region21: #{tpu_custom_call.1} parent=1 // pred_fallthru
      _
    %v45 = vld [vmem:[#allocation2] sm:$0xff]
    %v46 = vld [vmem:[#allocation5] sm:$0xff]
    %v47 = vld [vmem:[#allocation5 + $0x8] sm:$0xff]
    %v48 = vld [vmem:[#allocation5 + $0x10] sm:$0xff]
    %v49 = vld [vmem:[#allocation5 + $0x18] sm:$0xff]
    %vm50 = vcmask 261120
    %v52 = vsel %vm50, %v45, 0
    %54 = vmatpush.msra.mxu0 0.0
    %55 = vmatpush.msra.mxu0 0.0
    %56 = vmatpush.msra.mxu0 0.0
    %57 = vmatpush.msra.mxu0 0.0
    %58 = vmatpush.msra.mxu0 0.0
    %59 = vmatpush.msra.mxu0 0.0
    %60 = vmatpush.msra.mxu0 0.0
    %61 = vmatpush.msra.mxu0 0.0
    %62 = vmatpush.msra.mxu0 0.0
    %63 = vmatpush.msra.mxu0 0.0
    %64 = vmatpush.msra.mxu0 0.0
    %65 = vmatpush.msra.mxu0 0.0
    %66 = vmatpush.msra.mxu0 %v49
    %67 = vmatpush.msra.mxu0 %v48
    %68 = vmatpush.msra.mxu0 %v47
    %69 = vmatpush.msra.mxu0 %v46
    %70 = vmatmul.f32.gmra.mxu0 %v52
    %v71 = vpop.f32.mrf.mxu0
    %v72 = vadd.f32 0.0, %v71
    %73 = vdwg.mxu0
    %v74 = vld [vmem:[%s2] sm:$0x1]
    %v75 = vmax.f32 %v72, 0.0
    %v77 = vperm.slane %v74, 0
    %v79 = vmul.f32 %v75, %v77
    %80 = vmatpush.xpose.msra.mxu0 0.0
    %81 = vmatpush.xpose.msra.mxu0 0.0
    %82 = vmatpush.xpose.msra.mxu0 0.0
    %83 = vmatpush.xpose.msra.mxu0 0.0
    %84 = vmatpush.xpose.msra.mxu0 0.0
    %85 = vmatpush.xpose.msra.mxu0 0.0
    %86 = vmatpush.xpose.msra.mxu0 0.0
    %87 = vmatpush.xpose.msra.mxu0 0.0
    %88 = vmatpush.xpose.msra.mxu0 0.0
    %89 = vmatpush.xpose.msra.mxu0 0.0
    %90 = vmatpush.xpose.msra.mxu0 0.0
    %91 = vmatpush.xpose.msra.mxu0 0.0
    %92 = vmatpush.xpose.msra.mxu0 0.0
    %93 = vmatpush.xpose.msra.mxu0 0.0
    %94 = vmatpush.xpose.msra.mxu0 0.0
    %95 = vmatpush.xpose.msra.mxu0 %v79
    %96 = vmatmul.f32.gmra.mxu0 1.0
    %v97 = vpop.f32.mrf.mxu0
    %v98 = vadd.f32 0.0, %v97
    %99 = vdwg.mxu0
    %vm100 = vcmask 57344
    %101 = vst.msk [vmem:[#allocation7] sm:$0x1] %vm100, %v98
    // Predicated region
    $region22: #{tpu_custom_call.1} parent=1 // pred_check
      _
    $region23: #{tpu_custom_call.1} parent=1 // pred_check_branch
      %103 = sbr.rel (0) target = $region25
    $region24: #{tpu_custom_call.1} parent=1 // pred_region
      %105 = vsyncadd [#allocation4], 0
      %s107 = sshll.u32 [#allocation7], 4
      %s108 = int_to_ptr.vmem [resolvable:$true] %s107
      %s109 = sshll.u32 %s3, 4
      %s110 = int_to_ptr.hbm [resolvable:$true] %s109
      %112 = dma.vmem_to_hbm [thread:$0]  %s108, 16, %s110, [#allocation4]
    $region25: #{tpu_custom_call.1} parent=1 // pred_fallthru
      _
    // Predicated region
    $region26: #{tpu_custom_call.1} parent=1 // pred_check
      _
    $region27: #{tpu_custom_call.1} parent=1 // pred_check_branch
      %114 = sbr.rel (0) target = $region29
    $region28: #{tpu_custom_call.1} parent=1 // pred_region
      %116 = dma.done [#allocation4], 16
    $region29: #{tpu_custom_call.1} parent=1 // pred_fallthru
      _
    %117 = vsyncpa [#allocation3], 1
    %118 = vsyncpa [#allocation6], 1
    %119 = vsyncpa [#allocation4], 1

</llo_original>
